<compile_context>
chip_gen: v6e
topology: v6e:2x2x1
jax: 0.10.0
libtpu: 0.0.40
codegen_flags: <defaults>
</compile_context>

<pallas_src>
import jax
import jax.numpy as jnp
from jax.experimental import pallas as pl
from jax.experimental.pallas import tpu as pltpu

BN_EPS = 1e-5

# ---------------------------------------------------------------------------
# Parameter-slab layout (rows of a (24, 128) f32 array):
#   rows  0: 4  lanes 0:6   -> W_enc  = [W1 | W2]          (4, 6)
#   rows  4: 7  lanes 0:10  -> Wd1                          (3, 10)
#   row   7                  -> zero pad (8-row alignment)
#   rows  8:18  lanes 0:4   -> Wd2                          (10, 4)
#   row  18     lanes 0:6   -> gamma_enc = [g1 | g2]        (6,)
#   row  19     lanes 0:6   -> beta_enc  = [be1 | be2]      (6,)
#   row  20     lanes 0:10  -> gamma_d1                     (10,)
#   row  21     lanes 0:10  -> beta_d1                      (10,)
#   row  22     lanes 0:4   -> bd2 (final Linear bias)      (4,)
#   row  23                  -> zero pad
# Pre-BN biases b1/b2/bd1 are intentionally absent (no-ops under training BN).
# ---------------------------------------------------------------------------


def vae_kernel(xe_ref, p_ref, out_ref):
    x = xe_ref[:, 0:4]        # (B, 4) input
    eps = xe_ref[:, 4:7]      # (B, 3) reparametrization noise

    # ----- fused encoder: one MXU pass computes both branches -----
    h = jnp.dot(x, p_ref[0:4, 0:6], preferred_element_type=jnp.float32)   # (B, 6)

    # BatchNorm1d (training mode, batch stats, biased var) + affine + ReLU,
    # both branches at once (BN is per-column). Scale folded into one mul.
    mean = jnp.mean(h, axis=0, keepdims=True)
    hc = h - mean
    var = jnp.mean(hc * hc, axis=0, keepdims=True)
    s = p_ref[18:19, 0:6] * jax.lax.rsqrt(var + BN_EPS)
    enc = jnp.maximum(hc * s + p_ref[19:20, 0:6], 0.0)                    # (B, 6)

    mu = enc[:, 0:3]
    logvar = enc[:, 3:6]

    # ----- reparametrize: z = eps * exp(0.5 * logvar) + mu -----
    z = eps * jnp.exp(0.5 * logvar) + mu                                  # (B, 3)

    # ----- decoder: Linear(3,10) + BN(10) + ReLU -----
    d = jnp.dot(z, p_ref[4:7, 0:10], preferred_element_type=jnp.float32)  # (B, 10)
    dm = jnp.mean(d, axis=0, keepdims=True)
    dc = d - dm
    dv = jnp.mean(dc * dc, axis=0, keepdims=True)
    ds = p_ref[20:21, 0:10] * jax.lax.rsqrt(dv + BN_EPS)
    d1 = jnp.maximum(dc * ds + p_ref[21:22, 0:10], 0.0)                   # (B, 10)

    # ----- decoder: Linear(10, 4) (bias kept: no BN after it) -----
    dec_out = (
        jnp.dot(d1, p_ref[8:18, 0:4], preferred_element_type=jnp.float32)
        + p_ref[22:23, 0:4]
    )                                                                     # (B, 4)

    # ----- single lane-dense output slab: [mu | logvar | out | zeros] -----
    out_ref[...] = jnp.zeros(out_ref.shape, out_ref.dtype)
    out_ref[:, 0:6] = enc          # lanes 0:3 mu, lanes 3:6 logvar
    out_ref[:, 6:10] = dec_out     # lanes 6:10 reconstruction


@jax.jit
def vae_forward(x, eps, param_slab):
    """x: (B, 4) f32, eps: (B, 3) f32, param_slab: (24, 128) f32 (see layout)."""
    B = x.shape[0]
    # BN uses batch statistics over the whole block; keep B a full f32 sublane
    # tile so no padded rows could ever leak into the statistics.
    assert B % 8 == 0, "batch must be a multiple of 8 (f32 sublane tile)"

    xe = jnp.concatenate([x, eps], axis=1)                 # (B, 7) single input

    vmem_spec = pl.BlockSpec(memory_space=pltpu.MemorySpace.VMEM)
    packed = pl.pallas_call(
        vae_kernel,
        out_shape=jax.ShapeDtypeStruct((B, 128), jnp.float32),
        in_specs=[vmem_spec, vmem_spec],
        out_specs=vmem_spec,
    )(xe, param_slab)

    mu = packed[:, 0:3]
    logvar = packed[:, 3:6]
    out = packed[:, 6:10]
    return mu, logvar, out


# ---------------------------------------------------------------------------
# Parameter construction
# ---------------------------------------------------------------------------
def init_params(key):
    """Deterministic parameter init. Linear weights stored as (in, out)."""
    ks = jax.random.split(key, 8)
    p = {}
    # linear1: Linear(4, 3) + BN(3)
    p["w1"] = jax.random.normal(ks[0], (4, 3), jnp.float32) * 0.5
    p["b1"] = jax.random.normal(ks[1], (1, 3), jnp.float32) * 0.1
    p["g1"] = jnp.ones((1, 3), jnp.float32)
    p["be1"] = jnp.zeros((1, 3), jnp.float32)
    # linear2: Linear(4, 3) + BN(3)
    p["w2"] = jax.random.normal(ks[2], (4, 3), jnp.float32) * 0.5
    p["b2"] = jax.random.normal(ks[3], (1, 3), jnp.float32) * 0.1
    p["g2"] = jnp.ones((1, 3), jnp.float32)
    p["be2"] = jnp.zeros((1, 3), jnp.float32)
    # decoder: Linear(3, 10) + BN(10) + ReLU + Linear(10, 4)
    p["wd1"] = jax.random.normal(ks[4], (3, 10), jnp.float32) * 0.5
    p["bd1"] = jax.random.normal(ks[5], (1, 10), jnp.float32) * 0.1
    p["gd1"] = jnp.ones((1, 10), jnp.float32)
    p["bed1"] = jnp.zeros((1, 10), jnp.float32)
    p["wd2"] = jax.random.normal(ks[6], (10, 4), jnp.float32) * 0.5
    p["bd2"] = jax.random.normal(ks[7], (1, 4), jnp.float32) * 0.1
    return p


def pack_params(p):
    """Pack all (live) parameters into one pre-padded (24, 128) f32 slab.

    b1/b2/bd1 are dropped: biases added immediately before a training-mode
    BatchNorm are exactly removed by the mean subtraction.
    """
    slab = jnp.zeros((24, 128), jnp.float32)
    slab = slab.at[0:4, 0:3].set(p["w1"])
    slab = slab.at[0:4, 3:6].set(p["w2"])
    slab = slab.at[4:7, 0:10].set(p["wd1"])
    slab = slab.at[8:18, 0:4].set(p["wd2"])
    slab = slab.at[18, 0:3].set(p["g1"][0])
    slab = slab.at[18, 3:6].set(p["g2"][0])
    slab = slab.at[19, 0:3].set(p["be1"][0])
    slab = slab.at[19, 3:6].set(p["be2"][0])
    slab = slab.at[20, 0:10].set(p["gd1"][0])
    slab = slab.at[21, 0:10].set(p["bed1"][0])
    slab = slab.at[22, 0:4].set(p["bd2"][0])
    return slab


# ---------------------------------------------------------------------------
# Pure-JAX reference (mirrors the PyTorch forward, training-mode BN, with the
# original pre-BN biases included — validates that dropping them is a no-op).
# ---------------------------------------------------------------------------
def reference_forward(x, eps, p):
    def bn_relu(h, g, b):
        m = jnp.mean(h, axis=0, keepdims=True)
        v = jnp.mean((h - m) ** 2, axis=0, keepdims=True)
        return jnp.maximum((h - m) / jnp.sqrt(v + BN_EPS) * g + b, 0.0)

    mu = bn_relu(x @ p["w1"] + p["b1"], p["g1"], p["be1"])
    logvar = bn_relu(x @ p["w2"] + p["b2"], p["g2"], p["be2"])
    z = eps * jnp.exp(0.5 * logvar) + mu
    d1 = bn_relu(z @ p["wd1"] + p["bd1"], p["gd1"], p["bed1"])
    out = d1 @ p["wd2"] + p["bd2"]
    return mu, logvar, out


if __name__ == "__main__":
    key = jax.random.PRNGKey(0)
    k_x, k_eps, k_p = jax.random.split(key, 3)

    B = 8  # one full f32 sublane tile
    x = jax.random.normal(k_x, (B, 4), jnp.float32)
    eps = jax.random.normal(k_eps, (B, 3), jnp.float32)   # reparametrization noise
    params = init_params(k_p)
    param_slab = pack_params(params)                      # built once, reused per call

    mu, logvar, out = jax.block_until_ready(vae_forward(x, eps, param_slab))

    # sanity check against pure-JAX reference
    mu_r, logvar_r, out_r = reference_forward(x, eps, params)
    assert mu.shape == (B, 3) and logvar.shape == (B, 3) and out.shape == (B, 4)
    assert jnp.allclose(mu, mu_r, atol=1e-4, rtol=1e-4)
    assert jnp.allclose(logvar, logvar_r, atol=1e-4, rtol=1e-4)
    assert jnp.allclose(out, out_r, atol=1e-4, rtol=1e-4)

    print("KERNEL_OK")
</pallas_src>

<mosaic_0001>
module attributes {stable_mosaic.version = 11 : i64} {
  func.func @vae_kernel(%arg0: memref<8x7xf32, #tpu.memory_space<vmem>>, %arg1: memref<24x128xf32, #tpu.memory_space<vmem>>, %arg2: memref<8x128xf32, #tpu.memory_space<vmem>>) attributes {dimension_semantics = [], scalar_prefetch = 0 : i64, scratch_operands = 0 : i64, tpu.core_type = #tpu.core_type<tc>} {
    %c0 = arith.constant 0 : index
    %c0_0 = arith.constant 0 : index
    %0 = vector.load %arg0[%c0, %c0_0] : memref<8x7xf32, #tpu.memory_space<vmem>>, vector<8x4xf32>
    %c0_1 = arith.constant 0 : index
    %c4 = arith.constant 4 : index
    %1 = vector.load %arg0[%c0_1, %c4] : memref<8x7xf32, #tpu.memory_space<vmem>>, vector<8x3xf32>
    %c0_2 = arith.constant 0 : index
    %c0_3 = arith.constant 0 : index
    %2 = vector.load %arg1[%c0_2, %c0_3] : memref<24x128xf32, #tpu.memory_space<vmem>>, vector<4x6xf32>
    %cst = arith.constant dense<0.000000e+00> : vector<8x6xf32>
    %3 = tpu.matmul %0, %2, %cst {dimension_numbers = #tpu.dot_dimension_numbers<[1], [0], [0], [1], [0, 0, 1, 1], [], []>} : vector<8x4xf32>, vector<4x6xf32>, vector<8x6xf32> -> vector<8x6xf32>
    %cst_4 = arith.constant dense<0.000000e+00> : vector<6xf32>
    %4 = vector.multi_reduction <add>, %3, %cst_4 [0] : vector<8x6xf32> to vector<6xf32>
    %5 = vector.shape_cast %4 : vector<6xf32> to vector<1x6xf32>
    %cst_5 = arith.constant 8.000000e+00 : f32
    %6 = vector.broadcast %cst_5 : f32 to vector<1x6xf32>
    %7 = arith.divf %5, %6 : vector<1x6xf32>
    %8 = vector.broadcast %7 : vector<1x6xf32> to vector<8x6xf32>
    %9 = arith.subf %3, %8 : vector<8x6xf32>
    %10 = arith.mulf %9, %9 : vector<8x6xf32>
    %cst_6 = arith.constant dense<0.000000e+00> : vector<6xf32>
    %11 = vector.multi_reduction <add>, %10, %cst_6 [0] : vector<8x6xf32> to vector<6xf32>
    %12 = vector.shape_cast %11 : vector<6xf32> to vector<1x6xf32>
    %cst_7 = arith.constant 8.000000e+00 : f32
    %13 = vector.broadcast %cst_7 : f32 to vector<1x6xf32>
    %14 = arith.divf %12, %13 : vector<1x6xf32>
    %c18 = arith.constant 18 : index
    %c0_8 = arith.constant 0 : index
    %15 = vector.load %arg1[%c18, %c0_8] : memref<24x128xf32, #tpu.memory_space<vmem>>, vector<1x6xf32>
    %cst_9 = arith.constant 9.99999974E-6 : f32
    %16 = vector.broadcast %cst_9 : f32 to vector<1x6xf32>
    %17 = arith.addf %14, %16 : vector<1x6xf32>
    %18 = math.rsqrt %17 : vector<1x6xf32>
    %19 = arith.mulf %15, %18 : vector<1x6xf32>
    %20 = vector.broadcast %19 : vector<1x6xf32> to vector<8x6xf32>
    %21 = arith.mulf %9, %20 : vector<8x6xf32>
    %c19 = arith.constant 19 : index
    %c0_10 = arith.constant 0 : index
    %22 = vector.load %arg1[%c19, %c0_10] : memref<24x128xf32, #tpu.memory_space<vmem>>, vector<1x6xf32>
    %23 = vector.broadcast %22 : vector<1x6xf32> to vector<8x6xf32>
    %24 = arith.addf %21, %23 : vector<8x6xf32>
    %cst_11 = arith.constant 0.000000e+00 : f32
    %25 = vector.broadcast %cst_11 : f32 to vector<8x6xf32>
    %26 = arith.maximumf %24, %25 : vector<8x6xf32>
    %27 = vector.extract_strided_slice %26 {offsets = [0, 0], sizes = [8, 3], strides = [1, 1]} : vector<8x6xf32> to vector<8x3xf32>
    %28 = vector.extract_strided_slice %26 {offsets = [0, 3], sizes = [8, 3], strides = [1, 1]} : vector<8x6xf32> to vector<8x3xf32>
    %cst_12 = arith.constant 5.000000e-01 : f32
    %29 = vector.broadcast %cst_12 : f32 to vector<8x3xf32>
    %30 = arith.mulf %29, %28 : vector<8x3xf32>
    %31 = math.exp %30 : vector<8x3xf32>
    %32 = arith.mulf %1, %31 : vector<8x3xf32>
    %33 = arith.addf %32, %27 : vector<8x3xf32>
    %c4_13 = arith.constant 4 : index
    %c0_14 = arith.constant 0 : index
    %34 = vector.load %arg1[%c4_13, %c0_14] : memref<24x128xf32, #tpu.memory_space<vmem>>, vector<3x10xf32>
    %cst_15 = arith.constant dense<0.000000e+00> : vector<8x10xf32>
    %35 = tpu.matmul %33, %34, %cst_15 {dimension_numbers = #tpu.dot_dimension_numbers<[1], [0], [0], [1], [0, 0, 1, 1], [], []>} : vector<8x3xf32>, vector<3x10xf32>, vector<8x10xf32> -> vector<8x10xf32>
    %cst_16 = arith.constant dense<0.000000e+00> : vector<10xf32>
    %36 = vector.multi_reduction <add>, %35, %cst_16 [0] : vector<8x10xf32> to vector<10xf32>
    %37 = vector.shape_cast %36 : vector<10xf32> to vector<1x10xf32>
    %cst_17 = arith.constant 8.000000e+00 : f32
    %38 = vector.broadcast %cst_17 : f32 to vector<1x10xf32>
    %39 = arith.divf %37, %38 : vector<1x10xf32>
    %40 = vector.broadcast %39 : vector<1x10xf32> to vector<8x10xf32>
    %41 = arith.subf %35, %40 : vector<8x10xf32>
    %42 = arith.mulf %41, %41 : vector<8x10xf32>
    %cst_18 = arith.constant dense<0.000000e+00> : vector<10xf32>
    %43 = vector.multi_reduction <add>, %42, %cst_18 [0] : vector<8x10xf32> to vector<10xf32>
    %44 = vector.shape_cast %43 : vector<10xf32> to vector<1x10xf32>
    %cst_19 = arith.constant 8.000000e+00 : f32
    %45 = vector.broadcast %cst_19 : f32 to vector<1x10xf32>
    %46 = arith.divf %44, %45 : vector<1x10xf32>
    %c20 = arith.constant 20 : index
    %c0_20 = arith.constant 0 : index
    %47 = vector.load %arg1[%c20, %c0_20] : memref<24x128xf32, #tpu.memory_space<vmem>>, vector<1x10xf32>
    %cst_21 = arith.constant 9.99999974E-6 : f32
    %48 = vector.broadcast %cst_21 : f32 to vector<1x10xf32>
    %49 = arith.addf %46, %48 : vector<1x10xf32>
    %50 = math.rsqrt %49 : vector<1x10xf32>
    %51 = arith.mulf %47, %50 : vector<1x10xf32>
    %52 = vector.broadcast %51 : vector<1x10xf32> to vector<8x10xf32>
    %53 = arith.mulf %41, %52 : vector<8x10xf32>
    %c21 = arith.constant 21 : index
    %c0_22 = arith.constant 0 : index
    %54 = vector.load %arg1[%c21, %c0_22] : memref<24x128xf32, #tpu.memory_space<vmem>>, vector<1x10xf32>
    %55 = vector.broadcast %54 : vector<1x10xf32> to vector<8x10xf32>
    %56 = arith.addf %53, %55 : vector<8x10xf32>
    %cst_23 = arith.constant 0.000000e+00 : f32
    %57 = vector.broadcast %cst_23 : f32 to vector<8x10xf32>
    %58 = arith.maximumf %56, %57 : vector<8x10xf32>
    %c8 = arith.constant 8 : index
    %c0_24 = arith.constant 0 : index
    %59 = vector.load %arg1[%c8, %c0_24] : memref<24x128xf32, #tpu.memory_space<vmem>>, vector<10x4xf32>
    %cst_25 = arith.constant dense<0.000000e+00> : vector<8x4xf32>
    %60 = tpu.matmul %58, %59, %cst_25 {dimension_numbers = #tpu.dot_dimension_numbers<[1], [0], [0], [1], [0, 0, 1, 1], [], []>} : vector<8x10xf32>, vector<10x4xf32>, vector<8x4xf32> -> vector<8x4xf32>
    %c22 = arith.constant 22 : index
    %c0_26 = arith.constant 0 : index
    %61 = vector.load %arg1[%c22, %c0_26] : memref<24x128xf32, #tpu.memory_space<vmem>>, vector<1x4xf32>
    %62 = vector.broadcast %61 : vector<1x4xf32> to vector<8x4xf32>
    %63 = arith.addf %60, %62 : vector<8x4xf32>
    %cst_27 = arith.constant 0.000000e+00 : f32
    %64 = vector.broadcast %cst_27 : f32 to vector<8x128xf32>
    %c0_28 = arith.constant 0 : index
    %c0_29 = arith.constant 0 : index
    %65 = vector.load %arg2[%c0_28, %c0_29] : memref<8x128xf32, #tpu.memory_space<vmem>>, vector<8x128xf32>
    tpu.vector_store %arg2[%c0_28, %c0_29], %64 {strides = array<i32>} : memref<8x128xf32, #tpu.memory_space<vmem>>, vector<8x128xf32>,
    %c0_30 = arith.constant 0 : index
    %c0_31 = arith.constant 0 : index
    %66 = vector.load %arg2[%c0_30, %c0_31] : memref<8x128xf32, #tpu.memory_space<vmem>>, vector<8x6xf32>
    tpu.vector_store %arg2[%c0_30, %c0_31], %26 {strides = array<i32>} : memref<8x128xf32, #tpu.memory_space<vmem>>, vector<8x6xf32>,
    %c0_32 = arith.constant 0 : index
    %c6 = arith.constant 6 : index
    %67 = vector.load %arg2[%c0_32, %c6] : memref<8x128xf32, #tpu.memory_space<vmem>>, vector<8x4xf32>
    tpu.vector_store %arg2[%c0_32, %c6], %63 {strides = array<i32>} : memref<8x128xf32, #tpu.memory_space<vmem>>, vector<8x4xf32>,
    return
  }
}

</mosaic_0001>

<llo_original>
// kernel: vae_forward.1
$region0: #{vae_forward.1}
  #allocation0 [shape = 'u32[]', space=smem, size = 0x4, offset = 0x4, fixed_abs, tag = 'smem constant byte address 0x4 - core index']
  #allocation1 [shape = 'u32[144,128]{1,0:T(1,128)}', space=vmem, size = 0x12000, scoped, tag = 'internal scratch']
  %s0 = inlined_call_operand.vmem [shape: f32[8,7], index: 0, kind: input, shape index: {}]
  %s1 = inlined_call_operand.vmem [shape: f32[24,128], index: 1, kind: input, shape index: {}]
  %s2 = inlined_call_operand.vmem [shape: f32[8,128], index: 2, kind: output, shape index: {}]
  %s3 = sld [smem:[#allocation0]]
  $region18: #{vae_forward.1} parent=0
    _
  %s5 = ssub.s32 1, %s3
  %s6 = scalar_select 0, %s5, %s3
  // Predicated region
  $region2: #{vae_forward.1} parent=0 // pred_check
    _
  $region3: #{vae_forward.1} parent=0 // pred_check_branch
    %8 = sbr.rel (0) target = $region5
  $region4: #{vae_forward.1} parent=0 // pred_region
    _
  $region5: #{vae_forward.1} parent=0 // pred_fallthru
    _
  // Predicated region
  $region6: #{vae_forward.1} parent=0 // pred_check
    _
  $region7: #{vae_forward.1} parent=0 // pred_check_branch
    %10 = sbr.rel (0) target = $region9
  $region8: #{vae_forward.1} parent=0 // pred_region
    _
  $region9: #{vae_forward.1} parent=0 // pred_fallthru
    _
  %v11 = vld [vmem:[%s0] sm:$0xff]
  %v12 = vld [vmem:[%s1] sm:$0xf]
  %vm13 = vcmask 31744
  %v15 = vsel %vm13, %v11, 0
  %vm17 = vcmask 1043456
  %v19 = vsel %vm17, %v12, 0
  %21 = vmatprep.subr.mxu0 0.0
  %22 = vmatpush1.msra.mxu0 0.0
  %23 = vmatprep.subr.mxu0 0.0
  %24 = vmatpush1.msra.mxu0 0.0
  %25 = vmatprep.subr.mxu0 0.0
  %26 = vmatpush1.msra.mxu0 0.0
  %27 = vmatprep.subr.mxu0 0.0
  %28 = vmatpush1.msra.mxu0 0.0
  %29 = vmatprep.subr.mxu0 0.0
  %30 = vmatpush1.msra.mxu0 0.0
  %31 = vmatprep.subr.mxu0 0.0
  %32 = vmatpush1.msra.mxu0 0.0
  %33 = vmatprep.subr.mxu0 0.0
  %34 = vmatpush1.msra.mxu0 0.0
  %35 = vmatprep.subr.mxu0 0.0
  %36 = vmatpush1.msra.mxu0 0.0
  %37 = vmatprep.subr.mxu0 0.0
  %38 = vmatpush1.msra.mxu0 0.0
  %39 = vmatprep.subr.mxu0 0.0
  %40 = vmatpush1.msra.mxu0 0.0
  %41 = vmatprep.subr.mxu0 0.0
  %42 = vmatpush1.msra.mxu0 0.0
  %43 = vmatprep.subr.mxu0 0.0
  %44 = vmatpush1.msra.mxu0 0.0
  %45 = vmatprep.subr.mxu0 0.0
  %46 = vmatpush1.msra.mxu0 0.0
  %47 = vmatprep.subr.mxu0 0.0
  %48 = vmatpush1.msra.mxu0 0.0
  %49 = vmatprep.subr.mxu0 0.0
  %50 = vmatpush1.msra.mxu0 0.0
  %51 = vmatprep.subr.mxu0 0.0
  %52 = vmatpush1.msra.mxu0 %v19
  %53 = vmatprep.subr.mxu0 0.0
  %54 = vmatpush2.msra.mxu0 0.0
  %55 = vmatprep.subr.mxu0 0.0
  %56 = vmatpush2.msra.mxu0 0.0
  %57 = vmatprep.subr.mxu0 0.0
  %58 = vmatpush2.msra.mxu0 0.0
  %59 = vmatprep.subr.mxu0 0.0
  %60 = vmatpush2.msra.mxu0 0.0
  %61 = vmatprep.subr.mxu0 0.0
  %62 = vmatpush2.msra.mxu0 0.0
  %63 = vmatprep.subr.mxu0 0.0
  %64 = vmatpush2.msra.mxu0 0.0
  %65 = vmatprep.subr.mxu0 0.0
  %66 = vmatpush2.msra.mxu0 0.0
  %67 = vmatprep.subr.mxu0 0.0
  %68 = vmatpush2.msra.mxu0 0.0
  %69 = vmatprep.subr.mxu0 0.0
  %70 = vmatpush2.msra.mxu0 0.0
  %71 = vmatprep.subr.mxu0 0.0
  %72 = vmatpush2.msra.mxu0 0.0
  %73 = vmatprep.subr.mxu0 0.0
  %74 = vmatpush2.msra.mxu0 0.0
  %75 = vmatprep.subr.mxu0 0.0
  %76 = vmatpush2.msra.mxu0 0.0
  %77 = vmatprep.subr.mxu0 0.0
  %78 = vmatpush2.msra.mxu0 0.0
  %79 = vmatprep.subr.mxu0 0.0
  %80 = vmatpush2.msra.mxu0 0.0
  %81 = vmatprep.subr.mxu0 0.0
  %82 = vmatpush2.msra.mxu0 0.0
  %83 = vmatprep.subr.mxu0 0.0
  %84 = vmatpush2.msra.mxu0 0.0
  %85 = vmatprep.mubr.f32.mxu0 0.0
  %86 = vmatmul.mubr.f32.gmra.mxu0 %v15
  %v87 = vpop.f32.mrf.mxu0
  %v88 = vadd.f32 0.0, %v87
  %v89 = vpop.f32.mrf.mxu0
  %90 = vdwg.mxu0
  %vm91 = vcmask 48128
  %v92 = vsel %vm91, %v88, 0.0
  %v93 = vrot.slane %v92, 4
  %v94 = vadd.f32 %v92, %v93
  %v95 = vrot.slane %v94, 2
  %v96 = vadd.f32 %v94, %v95
  %v97 = vrot.slane %v96, 1
  %v98 = vadd.f32 %v96, %v97
  %v99 = vrcp.pop 8.0
  %v100 = vmul.f32 %v98, %v99
  %v101 = vsub.f32 %v88, %v100
  %v102 = vmul.f32 %v101, %v101
  %v103 = vsel %vm91, %v102, 0.0
  %v104 = vrot.slane %v103, 4
  %v105 = vadd.f32 %v103, %v104
  %v106 = vrot.slane %v105, 2
  %v107 = vadd.f32 %v105, %v106
  %v108 = vrot.slane %v107, 1
  %v109 = vadd.f32 %v107, %v108
  %v110 = vmul.f32 %v109, %v99
  %v111 = vld [vmem:[%s1 + $0x12] sm:$0x1]
  %v112 = vadd.f32 %v110, 1e-05
  %v113 = vrsqrt.pop %v112
  %v114 = vmul.f32 %v111, %v113
  %v115 = vlaneseq
  %v116 = vshrl.u32 %v115, 7
  %v117 = vsub.s32 0, %v116
  %v118 = vrot.slane %v114, %v117
  %v119 = vmul.f32 %v101, %v118
  %v120 = vld [vmem:[%s1 + $0x13] sm:$0x1]
  %v121 = vlaneseq
  %v122 = vshrl.u32 %v121, 7
  %v123 = vsub.s32 0, %v122
  %v124 = vrot.slane %v120, %v123
  %v125 = vadd.f32 %v119, %v124
  %v126 = vmax.f32 %v125, 0.0
  %v127 = vmul.f32 %v126, 0.5
  %v128 = vmul.f32 %v127, 1.442695
  %v129 = vpow.pop %v128
  %131 = vrot.lane.b32.xlu0 %v129, 1
  %v132 = vpop.permute.xlu0 %131
  %v134 = vmul.f32 %v11, %v132
  %136 = vrot.lane.b32.xlu0 %v126, 4
  %v137 = vpop.permute.xlu0 %136
  %v139 = vadd.f32 %v134, %v137
  %v140 = vld [vmem:[%s1 + $0x4] sm:$0x7]
  %142 = vrot.lane.b32.xlu0 %v139, 124
  %v143 = vpop.permute.xlu0 %142
  %vm144 = vcmask 23552
  %v145 = vsel %vm144, %v143, 0
  %vm147 = vcmask 1042432
  %v149 = vsel %vm147, %v140, 0
  %151 = vmatprep.subr.mxu0 0.0
  %152 = vmatpush1.msra.mxu0 0.0
  %153 = vmatprep.subr.mxu0 0.0
  %154 = vmatpush1.msra.mxu0 0.0
  %155 = vmatprep.subr.mxu0 0.0
  %156 = vmatpush1.msra.mxu0 0.0
  %157 = vmatprep.subr.mxu0 0.0
  %158 = vmatpush1.msra.mxu0 0.0
  %159 = vmatprep.subr.mxu0 0.0
  %160 = vmatpush1.msra.mxu0 0.0
  %161 = vmatprep.subr.mxu0 0.0
  %162 = vmatpush1.msra.mxu0 0.0
  %163 = vmatprep.subr.mxu0 0.0
  %164 = vmatpush1.msra.mxu0 0.0
  %165 = vmatprep.subr.mxu0 0.0
  %166 = vmatpush1.msra.mxu0 0.0
  %167 = vmatprep.subr.mxu0 0.0
  %168 = vmatpush1.msra.mxu0 0.0
  %169 = vmatprep.subr.mxu0 0.0
  %170 = vmatpush1.msra.mxu0 0.0
  %171 = vmatprep.subr.mxu0 0.0
  %172 = vmatpush1.msra.mxu0 0.0
  %173 = vmatprep.subr.mxu0 0.0
  %174 = vmatpush1.msra.mxu0 0.0
  %175 = vmatprep.subr.mxu0 0.0
  %176 = vmatpush1.msra.mxu0 0.0
  %177 = vmatprep.subr.mxu0 0.0
  %178 = vmatpush1.msra.mxu0 0.0
  %179 = vmatprep.subr.mxu0 0.0
  %180 = vmatpush1.msra.mxu0 0.0
  %181 = vmatprep.subr.mxu0 0.0
  %182 = vmatpush1.msra.mxu0 %v149
  %183 = vmatprep.subr.mxu0 0.0
  %184 = vmatpush2.msra.mxu0 0.0
  %185 = vmatprep.subr.mxu0 0.0
  %186 = vmatpush2.msra.mxu0 0.0
  %187 = vmatprep.subr.mxu0 0.0
  %188 = vmatpush2.msra.mxu0 0.0
  %189 = vmatprep.subr.mxu0 0.0
  %190 = vmatpush2.msra.mxu0 0.0
  %191 = vmatprep.subr.mxu0 0.0
  %192 = vmatpush2.msra.mxu0 0.0
  %193 = vmatprep.subr.mxu0 0.0
  %194 = vmatpush2.msra.mxu0 0.0
  %195 = vmatprep.subr.mxu0 0.0
  %196 = vmatpush2.msra.mxu0 0.0
  %197 = vmatprep.subr.mxu0 0.0
  %198 = vmatpush2.msra.mxu0 0.0
  %199 = vmatprep.subr.mxu0 0.0
  %200 = vmatpush2.msra.mxu0 0.0
  %201 = vmatprep.subr.mxu0 0.0
  %202 = vmatpush2.msra.mxu0 0.0
  %203 = vmatprep.subr.mxu0 0.0
  %204 = vmatpush2.msra.mxu0 0.0
  %205 = vmatprep.subr.mxu0 0.0
  %206 = vmatpush2.msra.mxu0 0.0
  %207 = vmatprep.subr.mxu0 0.0
  %208 = vmatpush2.msra.mxu0 0.0
  %209 = vmatprep.subr.mxu0 0.0
  %210 = vmatpush2.msra.mxu0 0.0
  %211 = vmatprep.subr.mxu0 0.0
  %212 = vmatpush2.msra.mxu0 0.0
  %213 = vmatprep.subr.mxu0 0.0
  %214 = vmatpush2.msra.mxu0 0.0
  %215 = vmatprep.mubr.f32.mxu0 0.0
  %216 = vmatmul.mubr.f32.gmra.mxu0 %v145
  %v217 = vpop.f32.mrf.mxu0
  %v218 = vadd.f32 0.0, %v217
  %v219 = vpop.f32.mrf.mxu0
  %220 = vdwg.mxu0
  %vm221 = vcmask 80896
  %v222 = vsel %vm221, %v218, 0.0
  %v223 = vrot.slane %v222, 4
  %v224 = vadd.f32 %v222, %v223
  %v225 = vrot.slane %v224, 2
  %v226 = vadd.f32 %v224, %v225
  %v227 = vrot.slane %v226, 1
  %v228 = vadd.f32 %v226, %v227
  %v229 = vmul.f32 %v228, %v99
  %v230 = vsub.f32 %v218, %v229
  %v231 = vmul.f32 %v230, %v230
  %v232 = vsel %vm221, %v231, 0.0
  %v233 = vrot.slane %v232, 4
  %v234 = vadd.f32 %v232, %v233
  %v235 = vrot.slane %v234, 2
  %v236 = vadd.f32 %v234, %v235
  %v237 = vrot.slane %v236, 1
  %v238 = vadd.f32 %v236, %v237
  %v239 = vmul.f32 %v238, %v99
  %v240 = vld [vmem:[%s1 + $0x14] sm:$0x1]
  %v241 = vadd.f32 %v239, 1e-05
  %v242 = vrsqrt.pop %v241
  %v243 = vmul.f32 %v240, %v242
  %v244 = vlaneseq
  %v245 = vshrl.u32 %v244, 7
  %v246 = vsub.s32 0, %v245
  %v247 = vrot.slane %v243, %v246
  %v248 = vmul.f32 %v230, %v247
  %v249 = vld [vmem:[%s1 + $0x15] sm:$0x1]
  %v250 = vlaneseq
  %v251 = vshrl.u32 %v250, 7
  %v252 = vsub.s32 0, %v251
  %v253 = vrot.slane %v249, %v252
  %v254 = vadd.f32 %v248, %v253
  %v255 = vmax.f32 %v254, 0.0
  %v256 = vld [vmem:[%s1 + $0x8] sm:$0xff]
  %v257 = vld [vmem:[%s1 + $0x10] sm:$0x3]
  %v258 = vld [vmem:[%s1 + $0x16] sm:$0x1]
  %v259 = vlaneseq
  %v260 = vshrl.u32 %v259, 7
  %v261 = vsub.s32 0, %v260
  %v262 = vrot.slane %v258, %v261
  %v264 = vsel %vm221, %v255, 0
  %vm266 = vcmask 1041408
  %v268 = vsel %vm266, %v257, 0
  %270 = vmatprep.subr.mxu0 0.0
  %271 = vmatpush1.msra.mxu0 0.0
  %272 = vmatprep.subr.mxu0 0.0
  %273 = vmatpush1.msra.mxu0 0.0
  %274 = vmatprep.subr.mxu0 0.0
  %275 = vmatpush1.msra.mxu0 0.0
  %276 = vmatprep.subr.mxu0 0.0
  %277 = vmatpush1.msra.mxu0 0.0
  %278 = vmatprep.subr.mxu0 0.0
  %279 = vmatpush1.msra.mxu0 0.0
  %280 = vmatprep.subr.mxu0 0.0
  %281 = vmatpush1.msra.mxu0 0.0
  %282 = vmatprep.subr.mxu0 0.0
  %283 = vmatpush1.msra.mxu0 0.0
  %284 = vmatprep.subr.mxu0 0.0
  %285 = vmatpush1.msra.mxu0 0.0
  %286 = vmatprep.subr.mxu0 0.0
  %287 = vmatpush1.msra.mxu0 0.0
  %288 = vmatprep.subr.mxu0 0.0
  %289 = vmatpush1.msra.mxu0 0.0
  %290 = vmatprep.subr.mxu0 0.0
  %291 = vmatpush1.msra.mxu0 0.0
  %292 = vmatprep.subr.mxu0 0.0
  %293 = vmatpush1.msra.mxu0 0.0
  %294 = vmatprep.subr.mxu0 0.0
  %295 = vmatpush1.msra.mxu0 0.0
  %296 = vmatprep.subr.mxu0 0.0
  %297 = vmatpush1.msra.mxu0 0.0
  %298 = vmatprep.subr.mxu0 0.0
  %299 = vmatpush1.msra.mxu0 %v268
  %300 = vmatprep.subr.mxu0 0.0
  %301 = vmatpush1.msra.mxu0 %v256
  %302 = vmatprep.subr.mxu0 0.0
  %303 = vmatpush2.msra.mxu0 0.0
  %304 = vmatprep.subr.mxu0 0.0
  %305 = vmatpush2.msra.mxu0 0.0
  %306 = vmatprep.subr.mxu0 0.0
  %307 = vmatpush2.msra.mxu0 0.0
  %308 = vmatprep.subr.mxu0 0.0
  %309 = vmatpush2.msra.mxu0 0.0
  %310 = vmatprep.subr.mxu0 0.0
  %311 = vmatpush2.msra.mxu0 0.0
  %312 = vmatprep.subr.mxu0 0.0
  %313 = vmatpush2.msra.mxu0 0.0
  %314 = vmatprep.subr.mxu0 0.0
  %315 = vmatpush2.msra.mxu0 0.0
  %316 = vmatprep.subr.mxu0 0.0
  %317 = vmatpush2.msra.mxu0 0.0
  %318 = vmatprep.subr.mxu0 0.0
  %319 = vmatpush2.msra.mxu0 0.0
  %320 = vmatprep.subr.mxu0 0.0
  %321 = vmatpush2.msra.mxu0 0.0
  %322 = vmatprep.subr.mxu0 0.0
  %323 = vmatpush2.msra.mxu0 0.0
  %324 = vmatprep.subr.mxu0 0.0
  %325 = vmatpush2.msra.mxu0 0.0
  %326 = vmatprep.subr.mxu0 0.0
  %327 = vmatpush2.msra.mxu0 0.0
  %328 = vmatprep.subr.mxu0 0.0
  %329 = vmatpush2.msra.mxu0 0.0
  %330 = vmatprep.subr.mxu0 0.0
  %331 = vmatpush2.msra.mxu0 0.0
  %332 = vmatprep.subr.mxu0 0.0
  %333 = vmatpush2.msra.mxu0 0.0
  %334 = vmatprep.mubr.f32.mxu0 0.0
  %335 = vmatmul.mubr.f32.gmra.mxu0 %v264
  %v336 = vpop.f32.mrf.mxu0
  %v337 = vadd.f32 %v262, %v336
  %v338 = vpop.f32.mrf.mxu0
  %339 = vdwg.mxu0
  %340 = vst [vmem:[%s2] sm:$0xff] 0.0
  %341 = vst.msk [vmem:[%s2] sm:$0xff] %vm91, %v126
  %343 = vrot.lane.b32.xlu0 %v337, 6
  %v344 = vpop.permute.xlu0 %343
  %vm346 = vcmask 80944
  %347 = vst.msk [vmem:[%s2] sm:$0xff] %vm346, %v344
  // Predicated region
  $region10: #{vae_forward.1} parent=0 // pred_check
    _
  $region11: #{vae_forward.1} parent=0 // pred_check_branch
    %349 = sbr.rel (0) target = $region13
  $region12: #{vae_forward.1} parent=0 // pred_region
    _
  $region13: #{vae_forward.1} parent=0 // pred_fallthru
    _
  // Predicated region
  $region14: #{vae_forward.1} parent=0 // pred_check
    _
  $region15: #{vae_forward.1} parent=0 // pred_check_branch
    %351 = sbr.rel (0) target = $region17
  $region16: #{vae_forward.1} parent=0 // pred_region
    _
  $region17: #{vae_forward.1} parent=0 // pred_fallthru
    _

</llo_original>
